<compile_context>
chip_gen: v7x
topology: tpu7x:2x2x1
jax: 0.10.0
libtpu: 0.0.40
codegen_flags: <defaults>
</compile_context>

<pallas_src>
import functools

import jax
import jax.numpy as jnp
from jax.experimental import pallas as pl
from jax.experimental.pallas import tpu as pltpu


def _eyeball_sdf_kernel(params_ref, x_ref, out_ref):
    # params_ref: SMEM (7,) f32 = [size, lcx, lcy, lcz, rcx, rcy, rcz]
    # x_ref:      VMEM (3, TILE)  SoA points (row 0 = x, 1 = y, 2 = z)
    # out_ref:    VMEM (2, TILE)  row 0 = left sdf, row 1 = right sdf
    size = params_ref[0]
    x0 = x_ref[0:1, :]
    x1 = x_ref[1:2, :]
    x2 = x_ref[2:3, :]

    dl2 = ((x0 - params_ref[1]) ** 2
           + (x1 - params_ref[2]) ** 2
           + (x2 - params_ref[3]) ** 2)
    dr2 = ((x0 - params_ref[4]) ** 2
           + (x1 - params_ref[5]) ** 2
           + (x2 - params_ref[6]) ** 2)

    out_ref[0:1, :] = jnp.sqrt(dl2) - size
    out_ref[1:2, :] = jnp.sqrt(dr2) - size


def eyeball_sdf_forward(x, left_center, right_center, eyeball_size_param,
                        *, bound, eyeball_min_size, eyeball_max_size,
                        tile_n=32768):
    """x: (..., 3) float32 points in [0,1]^3.  Returns (leye_sdf, reye_sdf), each (..., 1)."""
    orig_shape = x.shape
    assert orig_shape[-1] == 3
    xf = x.reshape(-1, 3).astype(jnp.float32)
    n = xf.shape[0]

    # --- tiling: lane axis = points, padded to a multiple of the tile ----------
    n_blk = pl.cdiv(n, 128)                         # 128-lane groups needed
    tile_blk = max(1, min(tile_n // 128, n_blk))
    # Prefer >= 2 grid steps so megacore (v7x) can shard the parallel axis.
    if tile_blk == n_blk and n_blk >= 2 and n_blk % 2 == 0:
        tile_blk = n_blk // 2
    tile = tile_blk * 128
    grid_n = pl.cdiv(n_blk * 128, tile)
    n_pad = grid_n * tile

    # SoA transpose (+ tail pad). Under jit these fuse into a single layout pass,
    # avoiding a separate full-array pad copy.
    xt = jnp.transpose(xf)                          # (3, n)
    if n_pad != n:
        xt = jnp.pad(xt, ((0, 0), (0, n_pad - n)))

    # get_eyeball_size(): sigmoid(param) * (hi - lo) + lo, hi/lo scaled by 1/(2*bound)
    scale = 1.0 / (2.0 * bound)
    lo = scale * eyeball_min_size
    hi = scale * eyeball_max_size
    size = (jax.nn.sigmoid(eyeball_size_param.astype(jnp.float32)) * (hi - lo)
            + lo).reshape(1)

    # Pack all scalar parameters into one SMEM vector (no per-step tiny DMAs).
    params = jnp.concatenate([
        size,
        left_center.astype(jnp.float32).reshape(3),
        right_center.astype(jnp.float32).reshape(3),
    ])                                              # (7,)

    out = pl.pallas_call(
        _eyeball_sdf_kernel,
        out_shape=jax.ShapeDtypeStruct((2, n_pad), jnp.float32),
        grid_spec=pltpu.PrefetchScalarGridSpec(
            num_scalar_prefetch=0,
            grid=(grid_n,),
            in_specs=[
                pl.BlockSpec(memory_space=pltpu.SMEM),       # packed scalars
                pl.BlockSpec((3, tile), lambda i: (0, i)),   # SoA points tile
            ],
            out_specs=pl.BlockSpec((2, tile), lambda i: (0, i)),
        ),
        compiler_params=pltpu.CompilerParams(
            dimension_semantics=("parallel",)),
    )(params, xt)

    leye = out[0, :n].reshape(*orig_shape[:-1], 1)
    reye = out[1, :n].reshape(*orig_shape[:-1], 1)
    return leye, reye


if __name__ == "__main__":
    # Synthetic "cfg" (mirrors the PyTorch module __init__).
    cfg = {
        "bound": 1.0,
        "eyeball_left_center": [0.10, 0.05, -0.20],
        "eyeball_right_center": [-0.10, 0.05, -0.20],
        "eyeball_min_size": 0.05,
        "eyeball_max_size": 0.15,
    }

    # Parameter init exactly as init_eyeball(): centers -> (c + 1) / 2, size -> zeros(1).
    left_center = (jnp.asarray(cfg["eyeball_left_center"], jnp.float32) + 1.0) / 2.0
    right_center = (jnp.asarray(cfg["eyeball_right_center"], jnp.float32) + 1.0) / 2.0
    eyeball_size_param = jnp.zeros((1,), jnp.float32)

    # Deterministic example input: batch of points in [0,1]^3, shape (2, 128, 3).
    key = jax.random.PRNGKey(0)
    x = jax.random.uniform(key, (2, 128, 3), dtype=jnp.float32)

    fwd = jax.jit(functools.partial(
        eyeball_sdf_forward,
        bound=cfg["bound"],
        eyeball_min_size=cfg["eyeball_min_size"],
        eyeball_max_size=cfg["eyeball_max_size"],
    ))
    leye_sdf, reye_sdf = fwd(x, left_center, right_center, eyeball_size_param)
    jax.block_until_ready((leye_sdf, reye_sdf))

    # Pure-JAX reference check (same math as the PyTorch forward).
    scale = 1.0 / (2.0 * cfg["bound"])
    lo, hi = scale * cfg["eyeball_min_size"], scale * cfg["eyeball_max_size"]
    size_ref = jax.nn.sigmoid(eyeball_size_param) * (hi - lo) + lo
    l_ref = jnp.sqrt(jnp.sum((x - left_center) ** 2, -1, keepdims=True)) - size_ref
    r_ref = jnp.sqrt(jnp.sum((x - right_center) ** 2, -1, keepdims=True)) - size_ref
    assert jnp.allclose(leye_sdf, l_ref, atol=1e-5), "left sdf mismatch"
    assert jnp.allclose(reye_sdf, r_ref, atol=1e-5), "right sdf mismatch"

    print("KERNEL_OK")
</pallas_src>

<mosaic_0001>
module attributes {stable_mosaic.version = 11 : i64} {
  func.func @_eyeball_sdf_kernel(%arg0: i32, %arg1: memref<7xf32, #tpu.memory_space<smem>>, %arg2: memref<3x128xf32, #tpu.memory_space<vmem>>, %arg3: memref<2x128xf32, #tpu.memory_space<vmem>>) attributes {dimension_semantics = [#tpu.dimension_semantics<parallel>], iteration_bounds = array<i64: 2>, scalar_prefetch = 0 : i64, scratch_operands = 0 : i64, tpu.core_type = #tpu.core_type<tc>, window_params = [{transform_indices = @transform_0, window_bounds = array<i64: 7>}, {transform_indices = @transform_1, window_bounds = array<i64: 3, 128>}, {transform_indices = @transform_2, window_bounds = array<i64: 2, 128>}]} {
    %c0 = arith.constant 0 : index
    %0 = memref.load %arg1[%c0] : memref<7xf32, #tpu.memory_space<smem>>
    %c0_0 = arith.constant 0 : index
    %c0_1 = arith.constant 0 : index
    %1 = vector.load %arg2[%c0_0, %c0_1] : memref<3x128xf32, #tpu.memory_space<vmem>>, vector<1x128xf32>
    %c1 = arith.constant 1 : index
    %c0_2 = arith.constant 0 : index
    %2 = vector.load %arg2[%c1, %c0_2] : memref<3x128xf32, #tpu.memory_space<vmem>>, vector<1x128xf32>
    %c2 = arith.constant 2 : index
    %c0_3 = arith.constant 0 : index
    %3 = vector.load %arg2[%c2, %c0_3] : memref<3x128xf32, #tpu.memory_space<vmem>>, vector<1x128xf32>
    %c1_4 = arith.constant 1 : index
    %4 = memref.load %arg1[%c1_4] : memref<7xf32, #tpu.memory_space<smem>>
    %5 = vector.broadcast %4 : f32 to vector<1x128xf32>
    %6 = arith.subf %1, %5 : vector<1x128xf32>
    %7 = arith.mulf %6, %6 : vector<1x128xf32>
    %c2_5 = arith.constant 2 : index
    %8 = memref.load %arg1[%c2_5] : memref<7xf32, #tpu.memory_space<smem>>
    %9 = vector.broadcast %8 : f32 to vector<1x128xf32>
    %10 = arith.subf %2, %9 : vector<1x128xf32>
    %11 = arith.mulf %10, %10 : vector<1x128xf32>
    %12 = arith.addf %7, %11 : vector<1x128xf32>
    %c3 = arith.constant 3 : index
    %13 = memref.load %arg1[%c3] : memref<7xf32, #tpu.memory_space<smem>>
    %14 = vector.broadcast %13 : f32 to vector<1x128xf32>
    %15 = arith.subf %3, %14 : vector<1x128xf32>
    %16 = arith.mulf %15, %15 : vector<1x128xf32>
    %17 = arith.addf %12, %16 : vector<1x128xf32>
    %c4 = arith.constant 4 : index
    %18 = memref.load %arg1[%c4] : memref<7xf32, #tpu.memory_space<smem>>
    %19 = vector.broadcast %18 : f32 to vector<1x128xf32>
    %20 = arith.subf %1, %19 : vector<1x128xf32>
    %21 = arith.mulf %20, %20 : vector<1x128xf32>
    %c5 = arith.constant 5 : index
    %22 = memref.load %arg1[%c5] : memref<7xf32, #tpu.memory_space<smem>>
    %23 = vector.broadcast %22 : f32 to vector<1x128xf32>
    %24 = arith.subf %2, %23 : vector<1x128xf32>
    %25 = arith.mulf %24, %24 : vector<1x128xf32>
    %26 = arith.addf %21, %25 : vector<1x128xf32>
    %c6 = arith.constant 6 : index
    %27 = memref.load %arg1[%c6] : memref<7xf32, #tpu.memory_space<smem>>
    %28 = vector.broadcast %27 : f32 to vector<1x128xf32>
    %29 = arith.subf %3, %28 : vector<1x128xf32>
    %30 = arith.mulf %29, %29 : vector<1x128xf32>
    %31 = arith.addf %26, %30 : vector<1x128xf32>
    %32 = math.sqrt %17 : vector<1x128xf32>
    %33 = vector.broadcast %0 : f32 to vector<1x128xf32>
    %34 = arith.subf %32, %33 : vector<1x128xf32>
    %c0_6 = arith.constant 0 : index
    %c0_7 = arith.constant 0 : index
    %35 = vector.load %arg3[%c0_6, %c0_7] : memref<2x128xf32, #tpu.memory_space<vmem>>, vector<1x128xf32>
    tpu.vector_store %arg3[%c0_6, %c0_7], %34 {strides = array<i32>} : memref<2x128xf32, #tpu.memory_space<vmem>>, vector<1x128xf32>,
    %36 = math.sqrt %31 : vector<1x128xf32>
    %37 = vector.broadcast %0 : f32 to vector<1x128xf32>
    %38 = arith.subf %36, %37 : vector<1x128xf32>
    %c1_8 = arith.constant 1 : index
    %c0_9 = arith.constant 0 : index
    %39 = vector.load %arg3[%c1_8, %c0_9] : memref<2x128xf32, #tpu.memory_space<vmem>>, vector<1x128xf32>
    tpu.vector_store %arg3[%c1_8, %c0_9], %38 {strides = array<i32>} : memref<2x128xf32, #tpu.memory_space<vmem>>, vector<1x128xf32>,
    return
  }
  func.func @transform_0(%arg0: i32) -> i32 {
    %c0_i32 = arith.constant 0 : i32
    %c0_i32_0 = arith.constant 0 : i32
    return %c0_i32 : i32
  }
  func.func @transform_1(%arg0: i32) -> (i32, i32) {
    %c0_i32 = arith.constant 0 : i32
    %c0_i32_0 = arith.constant 0 : i32
    return %c0_i32, %arg0 : i32, i32
  }
  func.func @transform_2(%arg0: i32) -> (i32, i32) {
    %c0_i32 = arith.constant 0 : i32
    %c0_i32_0 = arith.constant 0 : i32
    return %c0_i32, %arg0 : i32, i32
  }
}

</mosaic_0001>

<llo_original>
// kernel: eyeball_sdf_forward.1
$region0: #{eyeball_sdf_forward.1}
  #allocation0 [shape = 'u32[]', space=smem, size = 0x4, offset = 0x4, fixed_abs, tag = 'smem constant byte address 0x4 - core index']
  #allocation1 [shape = 'u32[144,128]{1,0:T(1,128)}', space=vmem, size = 0x12000, scoped, tag = 'internal scratch']
  %s0 = inlined_call_operand.vmem [shape: f32[7], index: 0, kind: input, shape index: {}]
  %s1 = inlined_call_operand.vmem [shape: f32[3,256], index: 1, kind: input, shape index: {}]
  %s2 = inlined_call_operand.vmem [shape: f32[2,256], index: 2, kind: output, shape index: {}]
  %s3 = sld [smem:[#allocation0]]
  $region45: #{eyeball_sdf_forward.1} parent=0
    _
  %s5 = ssub.s32 1, %s3
  %s6 = scalar_select 0, %s5, %s3
  $region1: #{eyeball_sdf_forward.1} parent=0
    #allocation2 [shape = 'u8[512]{0}', space=smem, size = 0x200, scoped, tag = 'input window, operand 0, single buffered']
    #allocation3 [shape = 's32[2]{0}', space=sflag, size = 0x8, scoped, tag = 'scoped memory for eyeball_sdf_forward.1']
    %7 = vsyncpa [#allocation3], 0
    loop: start=0, step=1, limit=4
    $region2: #{eyeball_sdf_forward.1} parent=1 // loop_pre_header
      _
    $region3: #{eyeball_sdf_forward.1} parent=1 // loop_header
      %s9 = sphi 0, %s13
      %p10 = scmp.ge.s32.totalorder %s9, 4
      %s17 = sphi 0, %s17
      %s19 = sphi 0, %s17
      %s20 = sphi 0, %s19
      %s34 = sphi 0, %s20
      %s40 = sphi 0, %s42
      %s43 = sphi 0, %s40
      %s44 = sphi 0, %s43
      %s60 = sphi 0, %s44
      %s66 = sphi 0, %s68
      %s69 = sphi 0, %s66
      %s70 = sphi 0, %s69
      %s86 = sphi 0, %s70
    $region4: #{eyeball_sdf_forward.1} parent=1 // loop_header_branch
      %12 = sbr.rel (%p10) target = $region8
    $region5: #{eyeball_sdf_forward.1} parent=1 // loop_body
      %s14 = ssub.s32 %s9, 1
      %s15 = ssub.s32 %s9, 2
      %s16 = sadd.s32 %s9, 1
      %s18 = sadd.s32 %s17, 1
      %p21 = scmp.eq.s32.totalorder %s9, 1
      %p22 = scmp.ne.s32.totalorder %s17, %s19
      %p23 = scmp.eq.s32.totalorder %s9, 0
      %p24 = por %p22, %p23
      %p25 = scmp.ne.s32.totalorder %s17, %s19
      %p26 = scmp.eq.s32.totalorder %s14, 1
      %p27 = por %p25, %p26
      %p28 = scmp.ne.s32.totalorder %s19, %s20
      %p29 = scmp.eq.s32.totalorder %s14, 0
      %p30 = por %p28, %p29
      %p31 = scmp.ne.s32.totalorder %s19, %s20
      %p32 = scmp.eq.s32.totalorder %s15, 1
      %p33 = por %p31, %p32
      %p35 = scmp.ne.s32.totalorder %s20, %s34
      %p36 = scmp.eq.s32.totalorder %s15, 0
      %p37 = por %p35, %p36
      %s38 = ssub.s32 %s9, %s16
      %p39 = scmp.eq.s32.totalorder %s38, 0
      %s41 = sadd.s32 %s40, 1
      %s42 = scalar_select %p39, %s40, %s41
      %p45 = pneg %p39
      %p46 = scmp.eq.s32.totalorder %s9, 1
      %p47 = por %p45, %p46
      %p48 = scmp.ne.s32.totalorder %s40, %s43
      %p49 = scmp.eq.s32.totalorder %s9, 0
      %p50 = por %p48, %p49
      %p51 = scmp.ne.s32.totalorder %s40, %s43
      %p52 = scmp.eq.s32.totalorder %s14, 1
      %p53 = por %p51, %p52
      %p54 = scmp.ne.s32.totalorder %s43, %s44
      %p55 = scmp.eq.s32.totalorder %s14, 0
      %p56 = por %p54, %p55
      %p57 = scmp.ne.s32.totalorder %s43, %s44
      %p58 = scmp.eq.s32.totalorder %s15, 1
      %p59 = por %p57, %p58
      %p61 = scmp.ne.s32.totalorder %s44, %s60
      %p62 = scmp.eq.s32.totalorder %s15, 0
      %p63 = por %p61, %p62
      %s64 = ssub.s32 %s9, %s16
      %p65 = scmp.eq.s32.totalorder %s64, 0
      %s67 = sadd.s32 %s66, 1
      %s68 = scalar_select %p65, %s66, %s67
      %p71 = pneg %p65
      %p72 = scmp.eq.s32.totalorder %s9, 1
      %p73 = por %p71, %p72
      %p74 = scmp.ne.s32.totalorder %s66, %s69
      %p75 = scmp.eq.s32.totalorder %s9, 0
      %p76 = por %p74, %p75
      %p77 = scmp.ne.s32.totalorder %s66, %s69
      %p78 = scmp.eq.s32.totalorder %s14, 1
      %p79 = por %p77, %p78
      %p80 = scmp.ne.s32.totalorder %s69, %s70
      %p81 = scmp.eq.s32.totalorder %s14, 0
      %p82 = por %p80, %p81
      %p83 = scmp.ne.s32.totalorder %s69, %s70
      %p84 = scmp.eq.s32.totalorder %s15, 1
      %p85 = por %p83, %p84
      %p87 = scmp.ne.s32.totalorder %s70, %s86
      %p88 = scmp.eq.s32.totalorder %s15, 0
      %p89 = por %p87, %p88
      %p90 = scmp.le.s32.totalorder 1, %s9
      %p91 = scmp.lt.s32.totalorder %s9, 3
      %p92 = pnand %p90, %p91
      %p93 = pneg %p92
      // Predicated region
      $region9: #{eyeball_sdf_forward.1} parent=5 // pred_check
        _
      $region10: #{eyeball_sdf_forward.1} parent=5 // pred_check_branch
        %95 = sbr.rel (%p92) target = $region12
      $region11: #{eyeball_sdf_forward.1} parent=5 // pred_region
        %s96 = ssub.s32 %s9, 1
        // Predicated region
        $region13: #{eyeball_sdf_forward.1} parent=11 // pred_check
          %p97 = pneg %p30
        $region14: #{eyeball_sdf_forward.1} parent=11 // pred_check_branch
          %99 = sbr.rel (%p97) target = $region16
        $region15: #{eyeball_sdf_forward.1} parent=11 // pred_region
          %s101 = ssub.s32 16, 16
          %102 = vsyncadd [#allocation3], %s101
          %s104 = sshll.u32 %s0, 4
          %s105 = int_to_ptr.vmem [resolvable:$true] %s104
          %107 = dma.vmem_to_smem %s105, 16, [#allocation2], [#allocation3]
        $region16: #{eyeball_sdf_forward.1} parent=11 // pred_fallthru
          _
      $region12: #{eyeball_sdf_forward.1} parent=5 // pred_fallthru
        _
      %p108 = scmp.lt.s32.totalorder %s9, 2
      // Predicated region
      $region17: #{eyeball_sdf_forward.1} parent=5 // pred_check
        %p109 = pneg %p108
      $region18: #{eyeball_sdf_forward.1} parent=5 // pred_check_branch
        %111 = sbr.rel (%p109) target = $region20
      $region19: #{eyeball_sdf_forward.1} parent=5 // pred_region
        // Predicated region
        $region21: #{eyeball_sdf_forward.1} parent=19 // pred_check
          %p112 = pneg %p50
        $region22: #{eyeball_sdf_forward.1} parent=19 // pred_check_branch
          %114 = sbr.rel (%p112) target = $region24
        $region23: #{eyeball_sdf_forward.1} parent=19 // pred_region
          %p115 = scmp.lt.s32.totalorder %s9, 1
          %s116 = scalar_select %p115, %s9, 1
          %s117 = smul.addr %s116, 4
          %s118 = scalar_lea.vmem %s1, %s117
        $region24: #{eyeball_sdf_forward.1} parent=19 // pred_fallthru
          _
      $region20: #{eyeball_sdf_forward.1} parent=5 // pred_fallthru
        _
      %p119 = scmp.le.s32.totalorder 1, %s9
      %p120 = scmp.lt.s32.totalorder %s9, 3
      %p121 = pnand %p119, %p120
      %p122 = pneg %p121
      // Predicated region
      $region25: #{eyeball_sdf_forward.1} parent=5 // pred_check
        _
      $region26: #{eyeball_sdf_forward.1} parent=5 // pred_check_branch
        %124 = sbr.rel (%p121) target = $region28
      $region27: #{eyeball_sdf_forward.1} parent=5 // pred_region
        %s125 = ssub.s32 %s9, 1
        // Predicated region
        $region29: #{eyeball_sdf_forward.1} parent=27 // pred_check
          %p126 = pneg %p30
        $region30: #{eyeball_sdf_forward.1} parent=27 // pred_check_branch
          %128 = sbr.rel (%p126) target = $region32
        $region31: #{eyeball_sdf_forward.1} parent=27 // pred_region
          %129 = dma.done [#allocation3], 16
        $region32: #{eyeball_sdf_forward.1} parent=27 // pred_fallthru
          _
        %130 = sfence
        %p131 = pneg %p30
        %p132 = pneg %p27
        %p133 = scmp.lt.s32.totalorder %s14, 1
        %s134 = scalar_select %p133, %s14, 1
        %s135 = smul.addr %s134, 4
        %s136 = scalar_lea.vmem %s1, %s135
        %p137 = pneg %p56
        %p138 = pneg %p53
        %p139 = pneg %p82
        %p140 = pneg %p79
        %p141 = scmp.lt.s32.totalorder %s14, 1
        %s142 = scalar_select %p141, %s14, 1
        %s143 = smul.addr %s142, 2
        %s144 = scalar_lea.vmem %s2, %s143
        %p145 = scmp.lt.s32.totalorder %s14, 1
        %s146 = scalar_select %p145, %s14, 1
        %s147 = smul.addr %s146, 4
        %s148 = scalar_lea.vmem %s1, %s147
        %p149 = scmp.lt.s32.totalorder %s14, 1
        %s150 = scalar_select %p149, %s14, 1
        %s151 = smul.addr %s150, 2
        %s152 = scalar_lea.vmem %s2, %s151
        %s153 = sld [smem:[#allocation2]]
        %v154 = vld [vmem:[%s148] sm:$0x1]
        %v155 = vld [vmem:[%s148 + $0x1] sm:$0x1]
        %v156 = vld [vmem:[%s148 + $0x2] sm:$0x1]
        %s157 = sld [smem:[#allocation2 + $0x1]]
        %v158 = vstv %s157
        %v159 = vsub.f32 %v154, %v158
        %v160 = vmul.f32 %v159, %v159
        %s161 = sld [smem:[#allocation2 + $0x2]]
        %v162 = vstv %s161
        %v163 = vsub.f32 %v155, %v162
        %v164 = vmul.f32 %v163, %v163
        %v165 = vadd.f32 %v160, %v164
        %s166 = sld [smem:[#allocation2 + $0x3]]
        %v167 = vstv %s166
        %v168 = vsub.f32 %v156, %v167
        %v169 = vmul.f32 %v168, %v168
        %v170 = vadd.f32 %v165, %v169
        %s171 = sld [smem:[#allocation2 + $0x4]]
        %v172 = vstv %s171
        %v173 = vsub.f32 %v154, %v172
        %v174 = vmul.f32 %v173, %v173
        %s175 = sld [smem:[#allocation2 + $0x5]]
        %v176 = vstv %s175
        %v177 = vsub.f32 %v155, %v176
        %v178 = vmul.f32 %v177, %v177
        %v179 = vadd.f32 %v174, %v178
        %s180 = sld [smem:[#allocation2 + $0x6]]
        %v181 = vstv %s180
        %v182 = vsub.f32 %v156, %v181
        %v183 = vmul.f32 %v182, %v182
        %v184 = vadd.f32 %v179, %v183
        %v185 = vrsqrt.pop %v170
        %v186 = vmul.f32 %v170, %v185
        %vm187 = vcmp.eq.f32.partialorder %v170, inf
        %v188 = vsel %vm187, %v170, %v186
        %vm189 = vcmp.eq.f32.partialorder %v170, 0.0
        %v190 = vand.u32 %v170, 2147483648
        %v191 = vsel %vm189, %v190, %v188
        %v192 = vstv %s153
        %v193 = vsub.f32 %v191, %v192
        %194 = vst [vmem:[%s152] sm:$0x1] %v193
        %v195 = vrsqrt.pop %v184
        %v196 = vmul.f32 %v184, %v195
        %vm197 = vcmp.eq.f32.partialorder %v184, inf
        %v198 = vsel %vm197, %v184, %v196
        %vm199 = vcmp.eq.f32.partialorder %v184, 0.0
        %v200 = vand.u32 %v184, 2147483648
        %v201 = vsel %vm199, %v200, %v198
        %v202 = vsub.f32 %v201, %v192
        %203 = vst [vmem:[%s152 + $0x1] sm:$0x1] %v202
        %p204 = scmp.lt.s32.totalorder %s14, 1
        %s205 = scalar_select %p204, %s14, 1
        %s206 = smul.addr %s205, 2
        %s207 = scalar_lea.vmem %s2, %s206
        // Predicated region
        $region33: #{eyeball_sdf_forward.1} parent=27 // pred_check
          %p208 = pneg %p79
        $region34: #{eyeball_sdf_forward.1} parent=27 // pred_check_branch
          %210 = sbr.rel (%p208) target = $region36
        $region35: #{eyeball_sdf_forward.1} parent=27 // pred_region
          _
        $region36: #{eyeball_sdf_forward.1} parent=27 // pred_fallthru
          _
      $region28: #{eyeball_sdf_forward.1} parent=5 // pred_fallthru
        _
      %p211 = scmp.le.s32.totalorder 2, %s9
      // Predicated region
      $region37: #{eyeball_sdf_forward.1} parent=5 // pred_check
        %p212 = pneg %p211
      $region38: #{eyeball_sdf_forward.1} parent=5 // pred_check_branch
        %214 = sbr.rel (%p212) target = $region40
      $region39: #{eyeball_sdf_forward.1} parent=5 // pred_region
        %s215 = ssub.s32 %s9, 2
        // Predicated region
        $region41: #{eyeball_sdf_forward.1} parent=39 // pred_check
          %p216 = pneg %p85
        $region42: #{eyeball_sdf_forward.1} parent=39 // pred_check_branch
          %218 = sbr.rel (%p216) target = $region44
        $region43: #{eyeball_sdf_forward.1} parent=39 // pred_region
          %p219 = scmp.lt.s32.totalorder %s15, 1
          %s220 = scalar_select %p219, %s15, 1
          %s221 = smul.addr %s220, 2
          %s222 = scalar_lea.vmem %s2, %s221
        $region44: #{eyeball_sdf_forward.1} parent=39 // pred_fallthru
          _
      $region40: #{eyeball_sdf_forward.1} parent=5 // pred_fallthru
        _
    $region6: #{eyeball_sdf_forward.1} parent=1 // loop_footer
      %s13 = sadd.s32 1, %s9
    $region7: #{eyeball_sdf_forward.1} parent=1 // loop_footer_branch
      %8 = sbr.rel target = $region3
    $region8: #{eyeball_sdf_forward.1} parent=1 // loop_exit
      _
    %223 = vsyncpa [#allocation3], 1
    %s224 = scalar_lea.sflag [#allocation3], 1
    %225 = vsyncpa %s224, 1

</llo_original>
